<compile_context>
chip_gen: v5e
topology: v5e:2x2
jax: 0.10.0
libtpu: 0.0.40
codegen_flags: <defaults>
</compile_context>

<pallas_src>
import math

import jax
import jax.numpy as jnp
import numpy as np
from jax.experimental import pallas as pl
from jax.experimental.pallas import tpu as pltpu


def _pos_embed_kernel(x_ref, table_ref, off_ref, o_ref):
    """x_ref: (TM, f*C) f32; table_ref: (f*C, f*H) f32; off_ref: (1, f*H) f32.

    phase[m, k] = x[m, c_k] * freq_k   (block-diagonal table, one non-zero per
                                        column -> effectively a scalar product
                                        routed through the idle MXU)
    out         = sin(phase + offset)  (offset = pi/2 on cos columns; pad
                                        columns have zero table/offset -> 0)
    Exactly one lane-dense, full-width store per grid step.
    """
    phase = jnp.dot(
        x_ref[...], table_ref[...],
        preferred_element_type=jnp.float32,
        precision=jax.lax.Precision.HIGHEST,
    )
    o_ref[...] = jnp.sin(phase + off_ref[...]).astype(o_ref.dtype)


def _build_tables(hidden_dim: int, input_dim: int, C: int, fold: int):
    """Host-side constants: block-diagonal (fold*C, fold*H) freq table and (1, fold*H) offsets."""
    freq_dim = hidden_dim // input_dim // 2
    freq = 1.0 / (10000.0 ** (np.arange(freq_dim, dtype=np.float32) / np.float32(freq_dim)))
    freq = freq.astype(np.float32)

    base_t = np.zeros((C, hidden_dim), dtype=np.float32)
    base_o = np.zeros((hidden_dim,), dtype=np.float32)
    for c in range(C):
        s = c * 2 * freq_dim
        base_t[c, s:s + freq_dim] = freq                       # sin columns
        base_t[c, s + freq_dim:s + 2 * freq_dim] = freq        # cos columns
        base_o[s + freq_dim:s + 2 * freq_dim] = np.float32(math.pi / 2.0)
    # Columns >= C*2*freq_dim stay all-zero -> sin(0) == 0 == required zero-pad.

    table = np.zeros((fold * C, fold * hidden_dim), dtype=np.float32)
    for j in range(fold):
        table[j * C:(j + 1) * C, j * hidden_dim:(j + 1) * hidden_dim] = base_t
    offset = np.tile(base_o, fold)[None, :]
    return jnp.asarray(table), jnp.asarray(offset)


def position_embedding(x, hidden_dim: int, input_dim: int = 2, out_dtype=jnp.float32):
    """JAX/Pallas equivalent of PositionEmbedding.forward. x: [B, N, C] -> [B, N, hidden_dim]."""
    B, N, C = x.shape
    freq_dim = hidden_dim // input_dim // 2
    assert freq_dim > 0, "hidden_dim too small for input_dim"
    assert C * 2 * freq_dim <= hidden_dim, "embedding wider than hidden_dim not supported"

    M = B * N

    # --- Lane fold: make the output block lane-dense when hidden_dim < 128. ---
    # Pick the largest fold factor <= 128//H that divides M exactly (so the
    # folded views are free row-major reshapes and no output slice is needed).
    f_max = max(1, 128 // hidden_dim)
    fold = 1
    for cand in range(min(f_max, M), 0, -1):
        if M % cand == 0:
            fold = cand
            break

    lane_w = fold * hidden_dim
    kdim = fold * C
    m_rows = M // fold

    table, offset = _build_tables(hidden_dim, input_dim, C, fold)
    x2d = x.reshape(m_rows, kdim).astype(jnp.float32)

    # --- Row tile: target ~2 MiB output tiles. ---
    # Double-buffered VMEM: 2 * tm * lane_w * 4 (out) + 2 * tm * 128 * 4
    # (lane-padded input) ~= 8-9 MiB worst case -> fits the 16 MiB v5e scoped
    # default and v7x's 32 MiB without raising vmem_limit_bytes.
    tm_target = max(8, ((2 << 20) // (lane_w * 4)) // 8 * 8)

    if m_rows <= tm_target:
        tm = m_rows                      # single block == full dim (allowed by the (8,128) rule)
        m_rows_pad = m_rows
    else:
        # Prefer a multiple-of-8 tile that divides m_rows exactly: no padded
        # tail -> no post-kernel out[:M] copy (which would double output traffic).
        tm = 0
        for cand in range(tm_target, 7, -8):
            if m_rows % cand == 0:
                tm = cand
                break
        if tm == 0:                      # ragged fallback: pad + slice (rare)
            tm = tm_target
        m_rows_pad = pl.cdiv(m_rows, tm) * tm

    if m_rows_pad != m_rows:
        x2d = jnp.pad(x2d, ((0, m_rows_pad - m_rows), (0, 0)))

    out = pl.pallas_call(
        _pos_embed_kernel,
        out_shape=jax.ShapeDtypeStruct((m_rows_pad, lane_w), out_dtype),
        grid_spec=pl.GridSpec(
            grid=(m_rows_pad // tm,),
            in_specs=[
                pl.BlockSpec((tm, kdim), lambda i: (i, 0)),       # folded x rows
                pl.BlockSpec((kdim, lane_w), lambda i: (0, 0)),   # freq table (resident)
                pl.BlockSpec((1, lane_w), lambda i: (0, 0)),      # phase offsets (resident)
            ],
            out_specs=pl.BlockSpec((tm, lane_w), lambda i: (i, 0)),
        ),
        compiler_params=pltpu.CompilerParams(
            # Rows are independent: let v7x's two TensorCores split the grid
            # (large inputs give many ~2 MiB steps, so both cores stay busy).
            dimension_semantics=("parallel",)),
    )(x2d, table, offset)

    if m_rows_pad != m_rows:
        out = out[:m_rows]               # only in the ragged fallback path

    # Unfold is a free row-major reshape: (m_rows, fold*H) -> (B, N, H).
    return out.reshape(B, N, hidden_dim)


def _reference(x, hidden_dim: int, input_dim: int = 2):
    """Pure-JAX reference mirroring the PyTorch module exactly."""
    B, N, C = x.shape
    freq_dim = hidden_dim // input_dim // 2
    freq = 1.0 / (10000.0 ** (jnp.arange(freq_dim, dtype=jnp.float32) / freq_dim))
    out = x.reshape(-1).astype(jnp.float32)[:, None] * freq[None, :]   # outer product
    out = jnp.concatenate([jnp.sin(out), jnp.cos(out)], axis=-1)
    out = out.reshape(B, N, -1)
    if out.shape[2] < hidden_dim:
        out = jnp.concatenate(
            [out, jnp.zeros((B, N, hidden_dim - out.shape[2]), jnp.float32)], axis=-1)
    return out


if __name__ == "__main__":
    hidden_dim = 32
    input_dim = 2
    B, N, C = 2, 8, input_dim

    key = jax.random.PRNGKey(0)
    x = jax.random.normal(key, (B, N, C), dtype=jnp.float32) * 4.0

    y = position_embedding(x, hidden_dim, input_dim)
    y = jax.block_until_ready(y)

    y_ref = _reference(x, hidden_dim, input_dim)
    assert y.shape == (B, N, hidden_dim)
    assert jnp.allclose(y, y_ref, atol=1e-4, rtol=1e-4), "mismatch vs reference"

    print("KERNEL_OK")
</pallas_src>

<mosaic_0001>
module attributes {stable_mosaic.version = 11 : i64} {
  func.func @_pos_embed_kernel(%arg0: i32, %arg1: memref<4x8xf32, #tpu.memory_space<vmem>>, %arg2: memref<8x128xf32, #tpu.memory_space<vmem>>, %arg3: memref<1x128xf32, #tpu.memory_space<vmem>>, %arg4: memref<4x128xf32, #tpu.memory_space<vmem>>) attributes {dimension_semantics = [#tpu.dimension_semantics<parallel>], iteration_bounds = array<i64: 1>, scalar_prefetch = 0 : i64, scratch_operands = 0 : i64, tpu.core_type = #tpu.core_type<tc>, window_params = [{transform_indices = @transform_0, window_bounds = array<i64: 4, 8>}, {pipeline_mode = #tpu.pipeline_mode<synchronous>, transform_indices = @transform_1, window_bounds = array<i64: 8, 128>}, {pipeline_mode = #tpu.pipeline_mode<synchronous>, transform_indices = @transform_2, window_bounds = array<i64: 1, 128>}, {transform_indices = @transform_3, window_bounds = array<i64: 4, 128>}]} {
    %c0 = arith.constant 0 : index
    %c0_0 = arith.constant 0 : index
    %0 = vector.load %arg1[%c0, %c0_0] : memref<4x8xf32, #tpu.memory_space<vmem>>, vector<4x8xf32>
    %c0_1 = arith.constant 0 : index
    %c0_2 = arith.constant 0 : index
    %1 = vector.load %arg2[%c0_1, %c0_2] : memref<8x128xf32, #tpu.memory_space<vmem>>, vector<8x128xf32>
    %cst = arith.constant dense<0.000000e+00> : vector<4x128xf32>
    %2 = tpu.matmul %0, %1, %cst {dimension_numbers = #tpu.dot_dimension_numbers<[1], [0], [0], [1], [0, 0, 1, 1], [], []>, precision = #tpu.contract_precision<fp32>} : vector<4x8xf32>, vector<8x128xf32>, vector<4x128xf32> -> vector<4x128xf32>
    %c0_3 = arith.constant 0 : index
    %c0_4 = arith.constant 0 : index
    %3 = vector.load %arg3[%c0_3, %c0_4] : memref<1x128xf32, #tpu.memory_space<vmem>>, vector<1x128xf32>
    %4 = vector.broadcast %3 : vector<1x128xf32> to vector<4x128xf32>
    %5 = arith.addf %2, %4 : vector<4x128xf32>
    %6 = math.sin %5 : vector<4x128xf32>
    %c0_5 = arith.constant 0 : index
    %c0_6 = arith.constant 0 : index
    %7 = vector.load %arg4[%c0_5, %c0_6] : memref<4x128xf32, #tpu.memory_space<vmem>>, vector<4x128xf32>
    tpu.vector_store %arg4[%c0_5, %c0_6], %6 {strides = array<i32>} : memref<4x128xf32, #tpu.memory_space<vmem>>, vector<4x128xf32>,
    return
  }
  func.func @transform_0(%arg0: i32) -> (i32, i32) {
    %c0_i32 = arith.constant 0 : i32
    %c0_i32_0 = arith.constant 0 : i32
    return %arg0, %c0_i32 : i32, i32
  }
  func.func @transform_1(%arg0: i32) -> (i32, i32) {
    %c0_i32 = arith.constant 0 : i32
    %c0_i32_0 = arith.constant 0 : i32
    %c0_i32_1 = arith.constant 0 : i32
    return %c0_i32, %c0_i32_0 : i32, i32
  }
  func.func @transform_2(%arg0: i32) -> (i32, i32) {
    %c0_i32 = arith.constant 0 : i32
    %c0_i32_0 = arith.constant 0 : i32
    %c0_i32_1 = arith.constant 0 : i32
    return %c0_i32, %c0_i32_0 : i32, i32
  }
  func.func @transform_3(%arg0: i32) -> (i32, i32) {
    %c0_i32 = arith.constant 0 : i32
    %c0_i32_0 = arith.constant 0 : i32
    return %arg0, %c0_i32 : i32, i32
  }
}

</mosaic_0001>

<llo_original>
// kernel: tpu_custom_call.1
$region0: #{tpu_custom_call.1}
  #allocation0 [shape = 'u32[]', space=smem, size = 0x4, offset = 0x4, fixed_abs, tag = 'smem constant byte address 0x4 - core index']
  #allocation1 [shape = 'u32[72,128]{1,0:T(1,128)}', space=vmem, size = 0x9000, scoped, tag = 'internal scratch']
  %s0 = inlined_call_operand.hbm [shape: f32[4,8], index: 0, kind: input, shape index: {}]
  %s1 = inlined_call_operand.hbm [shape: f32[8,128], index: 1, kind: input, shape index: {}]
  %s2 = inlined_call_operand.vmem [shape: f32[1,128], index: 2, kind: input, shape index: {}]
  %s3 = inlined_call_operand.hbm [shape: f32[4,128], index: 3, kind: output, shape index: {}]
  %s4 = sld [smem:[#allocation0]]
  $region30: #{tpu_custom_call.1} parent=0
    _
  %s6 = ssub.s32 1, %s4
  %s7 = scalar_select 0, %s6, %s4
  $region1: #{tpu_custom_call.1} parent=0
    #allocation2 [shape = 'u8[2048]{0}', space=vmem, size = 0x800, scoped, tag = 'input window, operand 0, single buffered']
    #allocation3 [shape = 's32[1]{0}', space=sflag, size = 0x4, scoped, tag = 'scoped memory for tpu_custom_call.1']
    #allocation4 [shape = 's32[1]{0}', space=sflag, size = 0x4, scoped, tag = 'scoped memory for tpu_custom_call.1']
    #allocation5 [shape = 'u8[4096]{0}', space=vmem, size = 0x1000, scoped, tag = 'input window, operand 1, single buffered']
    #allocation6 [shape = 's32[1]{0}', space=sflag, size = 0x4, scoped, tag = 'scoped memory for tpu_custom_call.1']
    #allocation7 [shape = 'u8[2048]{0}', space=vmem, size = 0x800, scoped, tag = 'output window, operand 0, single buffered']
    %8 = vsyncpa [#allocation3], 0
    %9 = vsyncpa [#allocation6], 0
    %10 = vsyncpa [#allocation4], 0
    // Predicated region
    $region2: #{tpu_custom_call.1} parent=1 // pred_check
      _
    $region3: #{tpu_custom_call.1} parent=1 // pred_check_branch
      %12 = sbr.rel (0) target = $region5
    $region4: #{tpu_custom_call.1} parent=1 // pred_region
      %14 = vsyncadd [#allocation3], 0
      %s16 = sshll.u32 %s0, 4
      %s17 = int_to_ptr.hbm [resolvable:$true] %s16
      %s18 = sshll.u32 [#allocation2], 4
      %s19 = int_to_ptr.vmem [resolvable:$true] %s18
      %21 = dma.hbm_to_vmem [thread:$0]  %s17, 64, %s19, [#allocation3]
    $region5: #{tpu_custom_call.1} parent=1 // pred_fallthru
      _
    // Predicated region
    $region6: #{tpu_custom_call.1} parent=1 // pred_check
      _
    $region7: #{tpu_custom_call.1} parent=1 // pred_check_branch
      %23 = sbr.rel (0) target = $region9
    $region8: #{tpu_custom_call.1} parent=1 // pred_region
      %25 = vsyncadd [#allocation6], 0
      %s27 = sshll.u32 %s1, 4
      %s28 = int_to_ptr.hbm [resolvable:$true] %s27
      %s29 = sshll.u32 [#allocation5], 4
      %s30 = int_to_ptr.vmem [resolvable:$true] %s29
      %32 = dma.hbm_to_vmem [thread:$0]  %s28, 128, %s30, [#allocation6]
    $region9: #{tpu_custom_call.1} parent=1 // pred_fallthru
      _
    // Predicated region
    $region10: #{tpu_custom_call.1} parent=1 // pred_check
      _
    $region11: #{tpu_custom_call.1} parent=1 // pred_check_branch
      %34 = sbr.rel (0) target = $region13
    $region12: #{tpu_custom_call.1} parent=1 // pred_region
      _
    $region13: #{tpu_custom_call.1} parent=1 // pred_fallthru
      _
    // Predicated region
    $region14: #{tpu_custom_call.1} parent=1 // pred_check
      _
    $region15: #{tpu_custom_call.1} parent=1 // pred_check_branch
      %36 = sbr.rel (0) target = $region17
    $region16: #{tpu_custom_call.1} parent=1 // pred_region
      %38 = dma.done [#allocation3], 64
    $region17: #{tpu_custom_call.1} parent=1 // pred_fallthru
      _
    // Predicated region
    $region18: #{tpu_custom_call.1} parent=1 // pred_check
      _
    $region19: #{tpu_custom_call.1} parent=1 // pred_check_branch
      %40 = sbr.rel (0) target = $region21
    $region20: #{tpu_custom_call.1} parent=1 // pred_region
      %42 = dma.done [#allocation6], 128
    $region21: #{tpu_custom_call.1} parent=1 // pred_fallthru
      _
    %v43 = vld [vmem:[#allocation2] sm:$0xf]
    %v44 = vld [vmem:[#allocation5] sm:$0xff]
    %v45 = vld [vmem:[%s2] sm:$0x1]
    %v47 = vperm.slane %v45, 0
    %vm49 = vcmask 64512
    %v51 = vsel %vm49, %v43, 0
    %53 = vmatpush.msra.mxu0 0.0
    %54 = vmatpush.msra.mxu0 0.0
    %55 = vmatpush.msra.mxu0 0.0
    %56 = vmatpush.msra.mxu0 0.0
    %57 = vmatpush.msra.mxu0 0.0
    %58 = vmatpush.msra.mxu0 0.0
    %59 = vmatpush.msra.mxu0 0.0
    %60 = vmatpush.msra.mxu0 0.0
    %61 = vmatpush.msra.mxu0 0.0
    %62 = vmatpush.msra.mxu0 0.0
    %63 = vmatpush.msra.mxu0 0.0
    %64 = vmatpush.msra.mxu0 0.0
    %65 = vmatpush.msra.mxu0 0.0
    %66 = vmatpush.msra.mxu0 0.0
    %67 = vmatpush.msra.mxu0 0.0
    %v68 = vand.u32 %v44, 4294901760
    %69 = vmatpush.msra.mxu0 %v68
    %v70 = vand.u32 %v51, 4294901760
    %v71 = vsub.f32 %v51, %v70
    %v72 = vand.u32 %v71, 4294901760
    %v73 = vsub.f32 %v71, %v72
    %v74 = vand.u32 %v73, 4294901760
    %75 = vmatmul.f32.gmra.mxu0 %v74
    %v76 = vpop.f32.mrf.mxu0
    %v77 = vadd.f32 %v47, %v76
    %78 = vdwg.mxu0
    %79 = vmatpush.msra.mxu0 0.0
    %80 = vmatpush.msra.mxu0 0.0
    %81 = vmatpush.msra.mxu0 0.0
    %82 = vmatpush.msra.mxu0 0.0
    %83 = vmatpush.msra.mxu0 0.0
    %84 = vmatpush.msra.mxu0 0.0
    %85 = vmatpush.msra.mxu0 0.0
    %86 = vmatpush.msra.mxu0 0.0
    %87 = vmatpush.msra.mxu0 0.0
    %88 = vmatpush.msra.mxu0 0.0
    %89 = vmatpush.msra.mxu0 0.0
    %90 = vmatpush.msra.mxu0 0.0
    %91 = vmatpush.msra.mxu0 0.0
    %92 = vmatpush.msra.mxu0 0.0
    %93 = vmatpush.msra.mxu0 0.0
    %v94 = vand.u32 %v44, 4294901760
    %v95 = vsub.f32 %v44, %v94
    %v96 = vand.u32 %v95, 4294901760
    %v97 = vsub.f32 %v95, %v96
    %v98 = vand.u32 %v97, 4294901760
    %99 = vmatpush.msra.mxu0 %v98
    %v100 = vand.u32 %v51, 4294901760
    %101 = vmatmul.f32.gmra.mxu0 %v100
    %v102 = vpop.f32.mrf.mxu0
    %v103 = vadd.f32 %v77, %v102
    %104 = vdwg.mxu0
    %105 = vmatpush.msra.mxu0 0.0
    %106 = vmatpush.msra.mxu0 0.0
    %107 = vmatpush.msra.mxu0 0.0
    %108 = vmatpush.msra.mxu0 0.0
    %109 = vmatpush.msra.mxu0 0.0
    %110 = vmatpush.msra.mxu0 0.0
    %111 = vmatpush.msra.mxu0 0.0
    %112 = vmatpush.msra.mxu0 0.0
    %113 = vmatpush.msra.mxu0 0.0
    %114 = vmatpush.msra.mxu0 0.0
    %115 = vmatpush.msra.mxu0 0.0
    %116 = vmatpush.msra.mxu0 0.0
    %117 = vmatpush.msra.mxu0 0.0
    %118 = vmatpush.msra.mxu0 0.0
    %119 = vmatpush.msra.mxu0 0.0
    %v120 = vand.u32 %v44, 4294901760
    %v121 = vsub.f32 %v44, %v120
    %122 = vmatpush.msra.mxu0 %v121
    %v123 = vand.u32 %v51, 4294901760
    %v124 = vsub.f32 %v51, %v123
    %125 = vmatmul.f32.gmra.mxu0 %v124
    %v126 = vpop.f32.mrf.mxu0
    %v127 = vadd.f32 %v103, %v126
    %128 = vdwg.mxu0
    %129 = vmatpush.msra.mxu0 0.0
    %130 = vmatpush.msra.mxu0 0.0
    %131 = vmatpush.msra.mxu0 0.0
    %132 = vmatpush.msra.mxu0 0.0
    %133 = vmatpush.msra.mxu0 0.0
    %134 = vmatpush.msra.mxu0 0.0
    %135 = vmatpush.msra.mxu0 0.0
    %136 = vmatpush.msra.mxu0 0.0
    %137 = vmatpush.msra.mxu0 0.0
    %138 = vmatpush.msra.mxu0 0.0
    %139 = vmatpush.msra.mxu0 0.0
    %140 = vmatpush.msra.mxu0 0.0
    %141 = vmatpush.msra.mxu0 0.0
    %142 = vmatpush.msra.mxu0 0.0
    %143 = vmatpush.msra.mxu0 0.0
    %v144 = vand.u32 %v44, 4294901760
    %145 = vmatpush.msra.mxu0 %v144
    %v146 = vand.u32 %v51, 4294901760
    %v147 = vsub.f32 %v51, %v146
    %v148 = vand.u32 %v147, 4294901760
    %149 = vmatmul.f32.gmra.mxu0 %v148
    %v150 = vpop.f32.mrf.mxu0
    %v151 = vadd.f32 %v127, %v150
    %152 = vdwg.mxu0
    %153 = vmatpush.msra.mxu0 0.0
    %154 = vmatpush.msra.mxu0 0.0
    %155 = vmatpush.msra.mxu0 0.0
    %156 = vmatpush.msra.mxu0 0.0
    %157 = vmatpush.msra.mxu0 0.0
    %158 = vmatpush.msra.mxu0 0.0
    %159 = vmatpush.msra.mxu0 0.0
    %160 = vmatpush.msra.mxu0 0.0
    %161 = vmatpush.msra.mxu0 0.0
    %162 = vmatpush.msra.mxu0 0.0
    %163 = vmatpush.msra.mxu0 0.0
    %164 = vmatpush.msra.mxu0 0.0
    %165 = vmatpush.msra.mxu0 0.0
    %166 = vmatpush.msra.mxu0 0.0
    %167 = vmatpush.msra.mxu0 0.0
    %v168 = vand.u32 %v44, 4294901760
    %v169 = vsub.f32 %v44, %v168
    %v170 = vand.u32 %v169, 4294901760
    %171 = vmatpush.msra.mxu0 %v170
    %v172 = vand.u32 %v51, 4294901760
    %173 = vmatmul.f32.gmra.mxu0 %v172
    %v174 = vpop.f32.mrf.mxu0
    %v175 = vadd.f32 %v151, %v174
    %176 = vdwg.mxu0
    %177 = vmatpush.msra.mxu0 0.0
    %178 = vmatpush.msra.mxu0 0.0
    %179 = vmatpush.msra.mxu0 0.0
    %180 = vmatpush.msra.mxu0 0.0
    %181 = vmatpush.msra.mxu0 0.0
    %182 = vmatpush.msra.mxu0 0.0
    %183 = vmatpush.msra.mxu0 0.0
    %184 = vmatpush.msra.mxu0 0.0
    %185 = vmatpush.msra.mxu0 0.0
    %186 = vmatpush.msra.mxu0 0.0
    %187 = vmatpush.msra.mxu0 0.0
    %188 = vmatpush.msra.mxu0 0.0
    %189 = vmatpush.msra.mxu0 0.0
    %190 = vmatpush.msra.mxu0 0.0
    %191 = vmatpush.msra.mxu0 0.0
    %v192 = vand.u32 %v44, 4294901760
    %193 = vmatpush.msra.mxu0 %v192
    %v194 = vand.u32 %v51, 4294901760
    %195 = vmatmul.f32.gmra.mxu0 %v194
    %v196 = vpop.f32.mrf.mxu0
    %v197 = vadd.f32 %v175, %v196
    %198 = vdwg.mxu0
    %v199 = vand.u32 2147483647, %v197
    %vm200 = vcmp.le.f32.partialorder %v199, 0.7853982
    %vm201 = vcmp.lt.s32.totalorder %v197, 0
    %v202 = vand.u32 %v197, 2139095040
    %v203 = vshrl.u32 %v202, 23
    %v204 = vsub.s32 %v203, 127
    %v205 = vand.u32 2147483647, %v197
    %v206 = vand.u32 %v205, 8388607
    %v207 = vor.u32 %v206, 8388608
    %v208 = vsub.s32 0, %v207
    %v209 = vadd.s32 %v204, 1
    %vm210 = vcmp.gt.s32.totalorder %v209, 0
    %v211 = vsel %vm210, %v209, 0
    %v212 = vshrl.u32 %v211, 5
    %v213 = vand.u32 %v211, 31
    %v214 = vsub.s32 32, %v213
    %v215 = vshrl.u32 683565275, %v214
    %v216 = vshll.u32 683565275, %v213
    %v217 = vshrl.u32 2475754826, %v214
    %v218 = vor.u32 %v216, %v217
    %v219 = vshll.u32 2475754826, %v213
    %v220 = vshrl.u32 2131351028, %v214
    %v221 = vor.u32 %v219, %v220
    %v222 = vshll.u32 2131351028, %v213
    %v223 = vshrl.u32 2102212464, %v214
    %v224 = vor.u32 %v222, %v223
    %v225 = vshll.u32 2102212464, %v213
    %v226 = vshrl.u32 920167782, %v214
    %v227 = vor.u32 %v225, %v226
    %v228 = vshll.u32 920167782, %v213
    %v229 = vshrl.u32 1326507024, %v214
    %v230 = vor.u32 %v228, %v229
    %vm231 = vcmp.lt.s32.totalorder %v212, 1
    %vm232 = vcmp.lt.s32.totalorder %v212, 2
    %vm233 = vcmp.lt.s32.totalorder %v212, 3
    %vm234 = vcmp.lt.s32.totalorder %v212, 4
    %v235 = vsel %vm231, %v215, %v218
    %v236 = vsel %vm234, %v224, 2102212464
    %v237 = vsel %vm233, %v221, %v236
    %v238 = vsel %vm232, %v235, %v237
    %v239 = vsel %vm231, %v218, %v221
    %v240 = vsel %vm234, %v227, 920167782
    %v241 = vsel %vm233, %v224, %v240
    %v242 = vsel %vm232, %v239, %v241
    %v243 = vsel %vm231, %v221, %v224
    %v244 = vsel %vm234, %v230, 1326507024
    %v245 = vsel %vm233, %v227, %v244
    %v246 = vsel %vm232, %v243, %v245
    %v247 = vshll.u32 %v207, 8
    %v248 = vand.u32 %v247, 65535
    %v249 = vshrl.u32 %v247, 16
    %v250 = vand.u32 %v246, 65535
    %v251 = vshrl.u32 %v246, 16
    %v252 = vmul.u32 %v248, %v250
    %v253 = vmul.u32 %v248, %v251
    %v254 = vmul.u32 %v249, %v250
    %v255 = vmul.u32 %v249, %v251
    %v256 = vshll.u32 %v253, 16
    %v257 = vshrl.u32 %v253, 16
    %v258 = vshll.u32 %v254, 16
    %v259 = vshrl.u32 %v254, 16
    %vm260 = vc.u32 %v252, %v256
    %v261 = vsel %vm260, 1, 0
    %v262 = vadd.s32 %v252, %v256
    %v263 = vadd.s32 %v255, %v261
    %vm264 = vc.u32 %v262, %v258
    %v265 = vsel %vm264, 1, 0
    %v266 = vadd.s32 %v262, %v258
    %v267 = vadd.s32 %v263, %v265
    %v268 = vadd.s32 %v267, %v257
    %v269 = vadd.s32 %v268, %v259
    %v270 = vand.u32 %v247, 65535
    %v271 = vshrl.u32 %v247, 16
    %v272 = vand.u32 %v242, 65535
    %v273 = vshrl.u32 %v242, 16
    %v274 = vmul.u32 %v270, %v272
    %v275 = vmul.u32 %v270, %v273
    %v276 = vmul.u32 %v271, %v272
    %v277 = vmul.u32 %v271, %v273
    %v278 = vshll.u32 %v275, 16
    %v279 = vshrl.u32 %v275, 16
    %v280 = vshll.u32 %v276, 16
    %v281 = vshrl.u32 %v276, 16
    %vm282 = vc.u32 %v274, %v278
    %v283 = vsel %vm282, 1, 0
    %v284 = vadd.s32 %v274, %v278
    %v285 = vadd.s32 %v277, %v283
    %vm286 = vc.u32 %v284, %v280
    %v287 = vsel %vm286, 1, 0
    %v288 = vadd.s32 %v284, %v280
    %v289 = vadd.s32 %v285, %v287
    %v290 = vadd.s32 %v289, %v279
    %v291 = vadd.s32 %v290, %v281
    %v292 = vmul.u32 %v247, %v238
    %v293 = vadd.s32 %v269, %v288
    %vm294 = vc.u32 %v269, %v288
    %v295 = vadd.s32 %v291, 1
    %v296 = vsel %vm294, %v295, %v291
    %v297 = vadd.s32 %v292, %v296
    %v298 = vadd.s32 %v297, 536870912
    %v299 = vshrl.u32 %v298, 30
    %v300 = vshll.u32 %v299, 30
    %v301 = vsub.s32 %v297, %v300
    %vm302 = vcmp.lt.s32.totalorder %v301, 0
    %v303 = vsub.s32 0, %v301
    %v304 = vsel %vm302, %v303, %v301
    %v305 = vclz %v304
    %v306 = vsub.s32 %v305, 2
    %vm307 = vcmp.gt.s32.totalorder 0, %v306
    %v308 = vsel %vm307, 0, %v306
    %v309 = vsub.s32 32, %v308
    %v310 = vshll.u32 %v301, %v308
    %v311 = vshrl.u32 %v293, %v309
    %v312 = vor.u32 %v310, %v311
    %v313 = vsub.s32 4294967266, %v308
    %v314 = vadd.s32 %v313, 127
    %v315 = vshll.u32 %v314, 23
    %v316 = vor.u32 4788187, %v315
    %v317 = vand.u32 2147483647, %v316
    %v319 = vcvt.s32.f32 %v312
    %v320 = vmul.f32 %v319, %v317
    %v321 = vxor.u32 %v320, 2147483648
    %v322 = vsel %vm201, %v321, %v320
    %v323 = vsub.s32 4, %v299
    %v324 = vsel %vm201, %v323, %v299
    %v325 = vsel %vm200, %v197, %v322
    %v326 = vsel %vm200, 0, %v324
    %v327 = vmul.f32 %v325, %v325
    %v328 = vmul.f32 %v327, -0.001358992
    %v329 = vadd.f32 %v328, 0.041655596
    %v330 = vmul.f32 %v327, %v329
    %v331 = vadd.f32 %v330, -0.4999988
    %v332 = vmul.f32 %v327, %v331
    %v333 = vadd.f32 1.0, %v332
    %v334 = vmul.f32 %v325, %v325
    %v335 = vmul.f32 %v334, -0.00019511016
    %v336 = vadd.f32 %v335, 0.008332121
    %v337 = vmul.f32 %v334, %v336
    %v338 = vadd.f32 %v337, -0.16666654
    %v339 = vmul.f32 %v334, %v338
    %v340 = vadd.f32 %v339, 1.0
    %v341 = vmul.f32 %v340, %v325
    %vm342 = vweird.f32 %v197
    %v343 = vadd.s32 %v326, 3
    %v344 = vand.u32 %v343, 3
    %vm345 = vcmp.lt.s32.totalorder %v344, 2
    %vm346 = vcmp.eq.s32.totalorder %v344, 0
    %v347 = vxor.u32 %v341, 2147483648
    %v348 = vsel %vm346, %v333, %v347
    %vm349 = vcmp.eq.s32.totalorder %v344, 2
    %v350 = vxor.u32 %v333, 2147483648
    %v351 = vsel %vm349, %v350, %v341
    %v352 = vsel %vm345, %v348, %v351
    %v353 = vsel %vm342, nan, %v352
    %354 = vst [vmem:[#allocation7] sm:$0xf] %v353
    // Predicated region
    $region22: #{tpu_custom_call.1} parent=1 // pred_check
      _
    $region23: #{tpu_custom_call.1} parent=1 // pred_check_branch
      %356 = sbr.rel (0) target = $region25
    $region24: #{tpu_custom_call.1} parent=1 // pred_region
      %358 = vsyncadd [#allocation4], 0
      %s360 = sshll.u32 [#allocation7], 4
      %s361 = int_to_ptr.vmem [resolvable:$true] %s360
      %s362 = sshll.u32 %s3, 4
      %s363 = int_to_ptr.hbm [resolvable:$true] %s362
      %365 = dma.vmem_to_hbm [thread:$0]  %s361, 64, %s363, [#allocation4]
    $region25: #{tpu_custom_call.1} parent=1 // pred_fallthru
      _
    // Predicated region
    $region26: #{tpu_custom_call.1} parent=1 // pred_check
      _
    $region27: #{tpu_custom_call.1} parent=1 // pred_check_branch
      %367 = sbr.rel (0) target = $region29
    $region28: #{tpu_custom_call.1} parent=1 // pred_region
      %369 = dma.done [#allocation4], 64
    $region29: #{tpu_custom_call.1} parent=1 // pred_fallthru
      _
    %370 = vsyncpa [#allocation3], 1
    %371 = vsyncpa [#allocation6], 1
    %372 = vsyncpa [#allocation4], 1

</llo_original>
